<compile_context>
chip_gen: v7x
topology: tpu7x:2x2x1
jax: 0.10.0
libtpu: 0.0.40
codegen_flags: <defaults>
</compile_context>

<pallas_src>
import functools

import jax
import jax.numpy as jnp
from jax.experimental import pallas as pl
from jax.experimental.pallas import tpu as pltpu


# ----------------------------- generation-aware configuration -----------------------------

def _round_up(x, m):
    return ((x + m - 1) // m) * m


@functools.lru_cache(maxsize=1)
def _tpu_config():
    """Best-effort hardware probe with conservative fallbacks."""
    kind = ""
    try:
        kind = jax.devices()[0].device_kind.lower().replace(" ", "")
    except Exception:
        pass
    vmem_cap = 64 * 1024 * 1024
    try:
        vmem_cap = int(getattr(pltpu.get_tpu_info(), "vmem_capacity_bytes", vmem_cap))
    except Exception:
        pass
    is_v7 = ("v7" in kind) or ("tpu7" in kind)
    has_int_mxu = (not is_v7) and any(t in kind for t in ("v4", "v5", "v6"))
    # v5e/v6e (128 MiB VMEM, integer MXU): wide N tile cuts activation HBM re-reads 2-4x.
    # v7x (64 MiB VMEM, 2 TCs, no integer MXU): smaller tiles, >=2 N tiles for load balance.
    tn_target = 256 if is_v7 else (1024 if has_int_mxu else 512)
    vmem_limit = max(min(int(vmem_cap * 0.45), 64 * 1024 * 1024), 24 * 1024 * 1024)
    return {
        "use_int8_mxu": has_int_mxu,
        "tm_target": 256,
        "tn_target": tn_target,
        "vmem_limit": vmem_limit,
        "min_n_tiles": 2 if is_v7 else 1,
    }


def _pick_tile(dim, target, align, min_tiles=1):
    """Balanced tile size: multiple of `align`, no bigger than the padded dim, and splitting
    the axis into >= min_tiles roughly equal tiles (avoids ~50% padded-row waste)."""
    n_tiles = max(min_tiles, -(-dim // target))
    t = _round_up(-(-dim // n_tiles), align)
    return min(t, _round_up(dim, align))


# ----------------------------- Pass 1: activation quantization -----------------------------

def _quant_kernel(x_ref, xq_ref, scale_ref):
    """Per-row abs-max int8 quantization of one (TM, K) tile (runs once per row)."""
    x = x_ref[...].astype(jnp.float32)                                 # (TM, K)
    amax = jnp.maximum(jnp.max(jnp.abs(x), axis=-1, keepdims=True), 1e-5)
    xq_ref[...] = jnp.clip(jnp.round(x * (127.0 / amax)), -128.0, 127.0).astype(jnp.int8)
    scale_ref[...] = amax * (1.0 / 127.0)                              # dequant row scale


def _quantize_activations(x2, tm):
    m_pad, K = x2.shape
    return pl.pallas_call(
        _quant_kernel,
        out_shape=(jax.ShapeDtypeStruct((m_pad, K), jnp.int8),
                   jax.ShapeDtypeStruct((m_pad, 1), jnp.float32)),
        grid_spec=pltpu.PrefetchScalarGridSpec(
            num_scalar_prefetch=0,
            grid=(m_pad // tm,),
            in_specs=[pl.BlockSpec((tm, K), lambda i: (i, 0))],
            out_specs=[pl.BlockSpec((tm, K), lambda i: (i, 0)),
                       pl.BlockSpec((tm, 1), lambda i: (i, 0))],
        ),
        compiler_params=pltpu.CompilerParams(dimension_semantics=("parallel",)),
    )(x2)


# ----------------------------- Pass 2: packed-int2 matmul -----------------------------

def _bitlinear_matmul_kernel(ws_ref, xq_ref, scale_ref, wp_ref, o_ref, w_scratch, *, use_int8):
    """One (TM, TN) output tile.  Grid = (N tiles [parallel], M tiles [arbitrary]).

    ws_ref:    SMEM (4,) f32   weight_scale (element 0 used as the global dequant scale)
    xq_ref:    VMEM (TM, K)    int8 pre-quantized activations
    scale_ref: VMEM (TM, 1)    f32 per-row dequant scales (amax / 127)
    wp_ref:    VMEM (Kp, TN)   int8 packed ternary weights (K-major, pre-transposed)
    o_ref:     VMEM (TM, TN)   bf16 output tile
    w_scratch: VMEM (K, TN)    unpacked weights (int8 or bf16), persistent across M axis
    """
    # Unpack the int2 ternary weights once per N tile (first M step) into a persistent
    # K-major scratch, so one full-K MXU matmul per tile and no per-step unpack/transpose.
    # CORRECTNESS INVARIANT: the M grid axis must stay "arbitrary" (sequential per core);
    # making it "parallel" would let a core consume a stale/uninitialized scratch.
    @pl.when(pl.program_id(1) == 0)
    def _unpack_weights():
        wp = wp_ref[...].astype(jnp.int32)                             # (Kp, TN)
        parts = [(((wp >> (2 * q)) & 3) - 1) for q in range(4)]        # each {-1, 0, 1}
        w_scratch[...] = jnp.concatenate(parts, axis=0).astype(w_scratch.dtype)

    if use_int8:
        # int8 x int8 -> int32 on the MXU (v4/v5e/v6e): ~2x bf16 throughput, half the
        # scratch bytes, no per-step activation cast.
        acc = jnp.dot(xq_ref[...], w_scratch[...],
                      preferred_element_type=jnp.int32).astype(jnp.float32)
    else:
        # v7x has no integer MXU: bf16 x bf16 -> f32 (int8 values are exact in bf16).
        acc = jnp.dot(xq_ref[...].astype(jnp.bfloat16), w_scratch[...],
                      preferred_element_type=jnp.float32)

    # Fused dequant: one (TM, 1) vector multiply, then a single broadcast multiply.
    row_scale = scale_ref[...] * ws_ref[0]                             # (amax/127) * weight_scale[0]
    o_ref[...] = (acc * row_scale).astype(jnp.bfloat16)


def _bitlinear_matmul(xq, row_scale, wp_t, ws_f32, *, tm, tn, cfg):
    m_pad, K = xq.shape
    Kp, n_pad = wp_t.shape
    use_int8 = cfg["use_int8_mxu"]
    scratch_dtype = jnp.int8 if use_int8 else jnp.bfloat16
    kernel = functools.partial(_bitlinear_matmul_kernel, use_int8=use_int8)
    # TODO(synk): consider pipeline_mode=pl.Buffered(3) on the activation spec once per-step
    # compute shrinks further; needs a bundle dump to confirm the activation DMA stays hidden.
    return pl.pallas_call(
        kernel,
        out_shape=jax.ShapeDtypeStruct((m_pad, n_pad), jnp.bfloat16),
        grid_spec=pltpu.PrefetchScalarGridSpec(
            num_scalar_prefetch=1,
            grid=(n_pad // tn, m_pad // tm),                           # (N tiles, M tiles)
            in_specs=[
                pl.BlockSpec((tm, K), lambda j, i, ws: (i, 0)),        # int8 activations
                pl.BlockSpec((tm, 1), lambda j, i, ws: (i, 0)),        # f32 row scales
                pl.BlockSpec((Kp, tn), lambda j, i, ws: (0, j)),       # int8 packed weights
            ],
            out_specs=pl.BlockSpec((tm, tn), lambda j, i, ws: (i, j)),
            scratch_shapes=[pltpu.VMEM((K, tn), scratch_dtype)],       # unpacked weight tile
        ),
        compiler_params=pltpu.CompilerParams(
            # N tiles parallel (megacore-safe: each core redoes the i==0 unpack for its own
            # N tiles); M tiles MUST stay "arbitrary" (see kernel docstring).
            dimension_semantics=("parallel", "arbitrary"),
            vmem_limit_bytes=cfg["vmem_limit"],
        ),
    )(ws_f32, xq, row_scale, wp_t)


# ----------------------------- public BitLinear API -----------------------------

def prepare_bitlinear_weights(w_packed, weight_scale, *, tn=None):
    """One-time parameter prep (moved out of the forward pass): K-major transpose of the
    packed int2 weight + N padding to the generation-appropriate tile width."""
    N, Kp = w_packed.shape
    cfg = _tpu_config()
    if tn is None:
        min_tiles = cfg["min_n_tiles"] if N >= 256 else 1
        tn = _pick_tile(N, cfg["tn_target"], 128, min_tiles=min_tiles)
    n_pad = _round_up(N, tn)
    wp_t = w_packed.T                                                  # (Kp, N) int8, K-major
    if n_pad != N:
        # byte 0b01010101 encodes ternary 0 in every slot -> padded output columns are 0.
        wp_t = jnp.pad(wp_t, ((0, 0), (0, n_pad - N)), constant_values=85)
    return {
        "wp_t": jnp.asarray(wp_t),
        "ws": weight_scale.astype(jnp.float32),     # 32-bit scalars for SMEM prefetch
        "n": int(N),
        "k": int(Kp * 4),
        "tn": int(tn),
    }


def bit_linear_prepared(x, prep, *, tm=None):
    """x: (..., K) bf16, prep from prepare_bitlinear_weights -> (..., N) bf16."""
    orig_shape = x.shape
    K = orig_shape[-1]
    assert K == prep["k"], "packed weight must have in_features // 4 columns"
    cfg = _tpu_config()

    x2 = x.reshape(-1, K).astype(jnp.bfloat16)
    M = x2.shape[0]
    if tm is None:
        tm = _pick_tile(M, cfg["tm_target"], 32)
    m_pad = _round_up(M, tm)
    if m_pad != M:
        x2 = jnp.pad(x2, ((0, m_pad - M), (0, 0)))

    # Pass 1: per-row abs-max int8 quantization, computed ONCE per row (previously redone
    # inside every (N tile, M tile) grid step).  Int8 also halves activation HBM traffic.
    xq, row_scale = _quantize_activations(x2, tm)

    # Pass 2: tiled packed-int2 matmul on the MXU.
    out = _bitlinear_matmul(xq, row_scale, prep["wp_t"], prep["ws"],
                            tm=tm, tn=prep["tn"], cfg=cfg)
    out = out[:M, :prep["n"]]
    return out.reshape(*orig_shape[:-1], prep["n"])


def bit_linear(x, w_packed, weight_scale):
    """Convenience wrapper matching the reference signature (prep done per call)."""
    return bit_linear_prepared(x, prepare_bitlinear_weights(w_packed, weight_scale))


# ----------------------------- pure-JAX reference (for checks) -----------------------------

def bitlinear_reference(x, w_packed, weight_scale):
    """Pure-JAX reference mirroring the kernel math exactly (f32 quant, multiply dequant)."""
    wp = w_packed.astype(jnp.int32)
    w_full = jnp.concatenate([(((wp >> (2 * q)) & 3) - 1) for q in range(4)],
                             axis=1).astype(jnp.float32)               # (N, K)
    xf = x.astype(jnp.float32)
    amax = jnp.maximum(jnp.max(jnp.abs(xf), axis=-1, keepdims=True), 1e-5)
    s = 127.0 / amax
    xq = jnp.clip(jnp.round(xf * s), -128.0, 127.0)
    acc = jnp.einsum('...k,nk->...n', xq, w_full, preferred_element_type=jnp.float32)
    inv_s = amax * (1.0 / 127.0)
    return (acc * inv_s * weight_scale[0].astype(jnp.float32)).astype(jnp.bfloat16)


# ----------------------------- synthetic parameter construction -----------------------------

def make_bitlinear_params(key, in_features, out_features):
    Kp = in_features // 4
    w_full = jax.random.randint(key, (out_features, in_features), -1, 2, dtype=jnp.int32)
    w_enc = w_full + 1                                                 # {0, 1, 2}
    packed = jnp.zeros((out_features, Kp), jnp.int32)
    for q in range(4):                                                 # slot q = q-th K-quarter
        packed = packed | (w_enc[:, q * Kp:(q + 1) * Kp] << (2 * q))
    w_packed = jax.lax.bitcast_convert_type(packed.astype(jnp.uint8), jnp.int8)
    weight_scale = jnp.array([0.5, 0.25, 0.125, 0.0625], dtype=jnp.bfloat16)
    return w_packed, weight_scale


# ----------------------------- Attention forward (plain JAX around the kernels) -------------

def _rope_cos_sin(seq_len, head_dim, theta):
    inv_freq = 1.0 / (theta ** (jnp.arange(0, head_dim, 2, dtype=jnp.float32) / head_dim))
    pos = jnp.arange(seq_len, dtype=jnp.float32)
    freqs = jnp.outer(pos, inv_freq)                                   # (S, hd/2)
    return jnp.cos(freqs), jnp.sin(freqs)


def _apply_rope(x, cos, sin):
    xf = x.astype(jnp.float32)                                         # (B, S, H, hd)
    x1, x2 = jnp.split(xf, 2, axis=-1)
    c = cos[None, :, None, :]
    sn = sin[None, :, None, :]
    return jnp.concatenate([x1 * c - x2 * sn, x1 * sn + x2 * c], axis=-1).astype(x.dtype)


def _rms_norm(x, weight, eps):
    xf = x.astype(jnp.float32)
    var = jnp.mean(xf * xf, axis=-1, keepdims=True)
    return (xf * jax.lax.rsqrt(var + eps) * weight.astype(jnp.float32)).astype(x.dtype)


def attention_forward(x, wqkv_fn, wo_fn, sub_norm_weight, *, n_heads, n_kv_heads, head_dim,
                      rope_theta, norm_eps):
    """x: (B, S, dim) bf16 -> (B, S, dim) bf16.

    TODO(synk): the original uses xformers rope_padded + a KV cache + AttnBias (ragged
    sequences) and fmha.flash; simplified here to in-context causal self-attention, and the
    O(S^2) f32 score path should become a flash-style Pallas kernel for realistic S.
    """
    B, S, _ = x.shape
    hpg = n_heads // n_kv_heads
    q_dim = n_heads * head_dim
    kv_dim = n_kv_heads * head_dim

    xqkv = wqkv_fn(x)                                                  # (B, S, q+2kv)
    xq = xqkv[..., :q_dim]
    xk = xqkv[..., q_dim:q_dim + kv_dim]
    xv = xqkv[..., q_dim + kv_dim:]

    q = xq.reshape(B, S, n_heads, head_dim)
    k = xk.reshape(B, S, n_kv_heads, head_dim)
    v = xv.reshape(B, S, n_kv_heads, head_dim)

    cos, sin = _rope_cos_sin(S, head_dim, rope_theta)
    q = _apply_rope(q, cos, sin)
    k = _apply_rope(k, cos, sin)

    # GQA via grouped einsum -- no materialized jnp.repeat of K/V.
    qf = q.reshape(B, S, n_kv_heads, hpg, head_dim).astype(jnp.float32)
    kf = k.astype(jnp.float32)
    vf = v.astype(jnp.float32)
    scores = jnp.einsum('bqhgd,bkhd->bhgqk', qf, kf) * (head_dim ** -0.5)
    causal = jnp.tril(jnp.ones((S, S), dtype=bool))
    scores = jnp.where(causal[None, None, None, :, :], scores, -jnp.inf)
    probs = jax.nn.softmax(scores, axis=-1)
    attn = jnp.einsum('bhgqk,bkhd->bqhgd', probs, vf)
    attn = attn.reshape(B, S, n_heads * head_dim).astype(jnp.bfloat16)

    attn = _rms_norm(attn, sub_norm_weight, norm_eps)
    return wo_fn(attn)


# ----------------------------- demo / correctness check -----------------------------

if __name__ == "__main__":
    batch, seq = 2, 8
    dim, head_dim, n_heads, n_kv_heads = 128, 32, 4, 2
    rope_theta, norm_eps = 10000.0, 1e-5
    qkv_out = (n_heads + 2 * n_kv_heads) * head_dim                    # 256

    key = jax.random.PRNGKey(0)
    kx, kqkv, kwo = jax.random.split(key, 3)

    x = jax.random.normal(kx, (batch, seq, dim), dtype=jnp.float32).astype(jnp.bfloat16)

    wqkv_packed, wqkv_scale = make_bitlinear_params(kqkv, dim, qkv_out)
    wo_packed, wo_scale = make_bitlinear_params(kwo, n_heads * head_dim, dim)
    sub_norm_weight = jnp.ones((dim,), dtype=jnp.bfloat16)

    # One-time weight preparation (transpose + N padding moved out of the forward pass).
    wqkv_prep = prepare_bitlinear_weights(wqkv_packed, wqkv_scale)
    wo_prep = prepare_bitlinear_weights(wo_packed, wo_scale)

    # --- direct check of the Pallas BitLinear path against the pure-JAX reference ---
    out_lin = jax.block_until_ready(bit_linear_prepared(x, wqkv_prep))
    ref_lin = jax.block_until_ready(bitlinear_reference(x, wqkv_packed, wqkv_scale))
    assert out_lin.shape == (batch, seq, qkv_out) and out_lin.dtype == jnp.bfloat16
    assert jnp.allclose(out_lin.astype(jnp.float32), ref_lin.astype(jnp.float32),
                        rtol=2e-2, atol=5e-2), "BitLinear Pallas kernel mismatch vs reference"

    # --- full Attention forward using the Pallas kernels for wqkv / wo ---
    attn_kwargs = dict(n_heads=n_heads, n_kv_heads=n_kv_heads, head_dim=head_dim,
                       rope_theta=rope_theta, norm_eps=norm_eps)
    out = jax.block_until_ready(attention_forward(
        x,
        lambda t: bit_linear_prepared(t, wqkv_prep),
        lambda t: bit_linear_prepared(t, wo_prep),
        sub_norm_weight, **attn_kwargs))
    assert out.shape == (batch, seq, dim) and out.dtype == jnp.bfloat16

    ref = jax.block_until_ready(attention_forward(
        x,
        lambda t: bitlinear_reference(t, wqkv_packed, wqkv_scale),
        lambda t: bitlinear_reference(t, wo_packed, wo_scale),
        sub_norm_weight, **attn_kwargs))
    assert jnp.allclose(out.astype(jnp.float32), ref.astype(jnp.float32),
                        rtol=5e-2, atol=1e-1), "Attention forward mismatch vs reference"

    print("KERNEL_OK")
</pallas_src>

<mosaic_0001>
module attributes {stable_mosaic.version = 11 : i64} {
  func.func @_quant_kernel(%arg0: i32, %arg1: memref<32x128xbf16, #tpu.memory_space<vmem>>, %arg2: memref<32x128xi8, #tpu.memory_space<vmem>>, %arg3: memref<32x1xf32, #tpu.memory_space<vmem>>) attributes {dimension_semantics = [#tpu.dimension_semantics<parallel>], iteration_bounds = array<i64: 1>, scalar_prefetch = 0 : i64, scratch_operands = 0 : i64, tpu.core_type = #tpu.core_type<tc>, window_params = [{transform_indices = @transform_0, window_bounds = array<i64: 32, 128>}, {transform_indices = @transform_1, window_bounds = array<i64: 32, 128>}, {transform_indices = @transform_2, window_bounds = array<i64: 32, 1>}]} {
    %c0 = arith.constant 0 : index
    %c0_0 = arith.constant 0 : index
    %0 = vector.load %arg1[%c0, %c0_0] : memref<32x128xbf16, #tpu.memory_space<vmem>>, vector<32x128xbf16>
    %1 = arith.extf %0 : vector<32x128xbf16> to vector<32x128xf32>
    %2 = math.absf %1 : vector<32x128xf32>
    %cst = arith.constant dense<0xFF800000> : vector<32xf32>
    %3 = vector.multi_reduction <maximumf>, %2, %cst [1] : vector<32x128xf32> to vector<32xf32>
    %4 = vector.shape_cast %3 : vector<32xf32> to vector<32x1xf32>
    %cst_1 = arith.constant 9.99999974E-6 : f32
    %5 = vector.broadcast %cst_1 : f32 to vector<32x1xf32>
    %6 = arith.maximumf %4, %5 : vector<32x1xf32>
    %cst_2 = arith.constant 1.270000e+02 : f32
    %7 = vector.broadcast %cst_2 : f32 to vector<32x1xf32>
    %8 = arith.divf %7, %6 : vector<32x1xf32>
    %9 = vector.broadcast %8 : vector<32x1xf32> to vector<32x128xf32>
    %10 = arith.mulf %1, %9 : vector<32x128xf32>
    %11 = math.roundeven %10 : vector<32x128xf32>
    %cst_3 = arith.constant -1.280000e+02 : f32
    %cst_4 = arith.constant 1.270000e+02 : f32
    %12 = vector.broadcast %cst_3 : f32 to vector<32x128xf32>
    %13 = arith.maximumf %12, %11 : vector<32x128xf32>
    %14 = vector.broadcast %cst_4 : f32 to vector<32x128xf32>
    %15 = arith.minimumf %14, %13 : vector<32x128xf32>
    %16 = arith.fptosi %15 : vector<32x128xf32> to vector<32x128xi8>
    %c0_5 = arith.constant 0 : index
    %c0_6 = arith.constant 0 : index
    %17 = vector.load %arg2[%c0_5, %c0_6] : memref<32x128xi8, #tpu.memory_space<vmem>>, vector<32x128xi8>
    tpu.vector_store %arg2[%c0_5, %c0_6], %16 {strides = array<i32>} : memref<32x128xi8, #tpu.memory_space<vmem>>, vector<32x128xi8>,
    %cst_7 = arith.constant 0.00787401571 : f32
    %18 = vector.broadcast %cst_7 : f32 to vector<32x1xf32>
    %19 = arith.mulf %6, %18 : vector<32x1xf32>
    %c0_8 = arith.constant 0 : index
    %c0_9 = arith.constant 0 : index
    %20 = vector.load %arg3[%c0_8, %c0_9] : memref<32x1xf32, #tpu.memory_space<vmem>>, vector<32x1xf32>
    tpu.vector_store %arg3[%c0_8, %c0_9], %19 {strides = array<i32>} : memref<32x1xf32, #tpu.memory_space<vmem>>, vector<32x1xf32>,
    return
  }
  func.func @transform_0(%arg0: i32) -> (i32, i32) {
    %c0_i32 = arith.constant 0 : i32
    %c0_i32_0 = arith.constant 0 : i32
    return %arg0, %c0_i32 : i32, i32
  }
  func.func @transform_1(%arg0: i32) -> (i32, i32) {
    %c0_i32 = arith.constant 0 : i32
    %c0_i32_0 = arith.constant 0 : i32
    return %arg0, %c0_i32 : i32, i32
  }
  func.func @transform_2(%arg0: i32) -> (i32, i32) {
    %c0_i32 = arith.constant 0 : i32
    %c0_i32_0 = arith.constant 0 : i32
    return %arg0, %c0_i32 : i32, i32
  }
}

</mosaic_0001>

<llo_original>
// kernel: tpu_custom_call.1
$region0: #{tpu_custom_call.1}
  #allocation0 [shape = 'u32[]', space=smem, size = 0x4, offset = 0x4, fixed_abs, tag = 'smem constant byte address 0x4 - core index']
  #allocation1 [shape = 'u32[144,128]{1,0:T(1,128)}', space=vmem, size = 0x12000, scoped, tag = 'internal scratch']
  %s0 = inlined_call_operand.hbm [shape: bf16[32,128], index: 0, kind: input, shape index: {}]
  %s1 = inlined_call_operand.hbm [shape: s8[32,128], index: 1, kind: output, shape index: {0}]
  %s2 = inlined_call_operand.vmem [shape: f32[32,1], index: 2, kind: output, shape index: {1}]
  %3 = xla_tuple %s1, %s2
  %s4 = sld [smem:[#allocation0]]
  $region26: #{tpu_custom_call.1} parent=0
    _
  %s6 = ssub.s32 1, %s4
  %s7 = scalar_select 0, %s6, %s4
  $region1: #{tpu_custom_call.1} parent=0
    #allocation2 [shape = 'u8[8192]{0}', space=vmem, size = 0x2000, scoped, tag = 'input window, operand 0, single buffered']
    #allocation3 [shape = 's32[1]{0}', space=sflag, size = 0x4, scoped, tag = 'scoped memory for tpu_custom_call.1']
    #allocation4 [shape = 's32[1]{0}', space=sflag, size = 0x4, scoped, tag = 'scoped memory for tpu_custom_call.1']
    #allocation5 [shape = 'u8[4096]{0}', space=vmem, size = 0x1000, scoped, tag = 'output window, operand 0, single buffered']
    %8 = vsyncpa [#allocation3], 0
    %9 = vsyncpa [#allocation4], 0
    // Predicated region
    $region2: #{tpu_custom_call.1} parent=1 // pred_check
      _
    $region3: #{tpu_custom_call.1} parent=1 // pred_check_branch
      %11 = sbr.rel (0) target = $region5
    $region4: #{tpu_custom_call.1} parent=1 // pred_region
      %s13 = ssub.s32 256, 256
      %14 = vsyncadd [#allocation3], %s13
      %s15 = sshll.u32 [#allocation2], 4
      %s16 = int_to_ptr.vmem [resolvable:$true] %s15
      %21 = dma.hbm_to_vmem [thread:$0]  %s0, 256, %s16, [#allocation3], 64, 64, 4
    $region5: #{tpu_custom_call.1} parent=1 // pred_fallthru
      _
    // Predicated region
    $region6: #{tpu_custom_call.1} parent=1 // pred_check
      _
    $region7: #{tpu_custom_call.1} parent=1 // pred_check_branch
      %23 = sbr.rel (0) target = $region9
    $region8: #{tpu_custom_call.1} parent=1 // pred_region
      %24 = dma.done [#allocation3], 256
    $region9: #{tpu_custom_call.1} parent=1 // pred_fallthru
      _
    %v25 = vld [vmem:[#allocation2] sm:$0xf]
    %v26 = vld [vmem:[#allocation2 + $0x4] sm:$0xf]
    %v27 = vld [vmem:[#allocation2 + $0x8] sm:$0xf]
    %v28 = vld [vmem:[#allocation2 + $0xc] sm:$0xf]
    %v29 = vunpack.c.l.bf16 %v25
    %v30 = vunpack.c.l.bf16 %v26
    %v31 = vunpack.c.l.bf16 %v27
    %v32 = vunpack.c.l.bf16 %v28
    %v33 = vand.u32 2147483647, %v29
    %v34 = vand.u32 2147483647, %v30
    %v35 = vand.u32 2147483647, %v31
    %v36 = vand.u32 2147483647, %v32
    %37 = vmax.xlane.f32.xlu0 %v33
    %v38 = vpop.xlane.xlu0 %37
    %39 = vmax.xlane.f32.xlu0 %v34
    %v40 = vpop.xlane.xlu0 %39
    %41 = vmax.xlane.f32.xlu0 %v35
    %v42 = vpop.xlane.xlu0 %41
    %43 = vmax.xlane.f32.xlu0 %v36
    %v44 = vpop.xlane.xlu0 %43
    %v45 = vmax.f32 %v38, 1e-05
    %v46 = vmax.f32 %v40, 1e-05
    %v47 = vmax.f32 %v42, 1e-05
    %v48 = vmax.f32 %v44, 1e-05
    %v49 = vrcp.pop %v45
    %v50 = vmul.f32 127.0, %v49
    %v51 = vrcp.pop %v46
    %v52 = vmul.f32 127.0, %v51
    %v53 = vrcp.pop %v47
    %v54 = vmul.f32 127.0, %v53
    %v55 = vrcp.pop %v48
    %v56 = vmul.f32 127.0, %v55
    %v57 = vmul.f32 %v29, %v50
    %v58 = vmul.f32 %v30, %v52
    %v59 = vmul.f32 %v31, %v54
    %v60 = vmul.f32 %v32, %v56
    %v61 = vround.ne.pseudo %v57
    %v62 = vround.ne.pseudo %v58
    %v63 = vround.ne.pseudo %v59
    %v64 = vround.ne.pseudo %v60
    %v65 = vmax.f32 %v61, -128.0
    %v66 = vmax.f32 %v62, -128.0
    %v67 = vmax.f32 %v63, -128.0
    %v68 = vmax.f32 %v64, -128.0
    %v69 = vmin.f32 %v65, 127.0
    %v70 = vmin.f32 %v66, 127.0
    %v71 = vmin.f32 %v67, 127.0
    %v72 = vmin.f32 %v68, 127.0
    %v73 = vtrunc.f32 %v69
    %v74 = vtrunc.f32 %v70
    %v75 = vtrunc.f32 %v71
    %v76 = vtrunc.f32 %v72
    %v77 = vpack.c.f32.eXmY %v73, %v74, 312
    %v81 = vpack.c.f32.eXmY %v75, %v76, 312
    %v85 = vpack.c.b8 %v81, %v77
    %87 = vst [vmem:[#allocation5] sm:$0xff] %v85
    %v88 = vmul.f32 %v45, 0.007874016
    %v89 = vmul.f32 %v46, 0.007874016
    %v90 = vmul.f32 %v47, 0.007874016
    %v91 = vmul.f32 %v48, 0.007874016
    %vm92 = vcmask 7168
    %93 = vst.msk [vmem:[%s2] sm:$0xff] %vm92, %v88
    %94 = vst.msk [vmem:[%s2 + $0x8] sm:$0xff] %vm92, %v89
    %95 = vst.msk [vmem:[%s2 + $0x10] sm:$0xff] %vm92, %v90
    %96 = vst.msk [vmem:[%s2 + $0x18] sm:$0xff] %vm92, %v91
    // Predicated region
    $region10: #{tpu_custom_call.1} parent=1 // pred_check
      _
    $region11: #{tpu_custom_call.1} parent=1 // pred_check_branch
      %98 = sbr.rel (0) target = $region13
    $region12: #{tpu_custom_call.1} parent=1 // pred_region
      %s100 = ssub.s32 128, 128
      %101 = vsyncadd [#allocation4], %s100
      %s103 = sshll.u32 [#allocation5], 4
      %s104 = int_to_ptr.vmem [resolvable:$true] %s103
      %106 = dma.vmem_to_hbm [thread:$0]  %s104, 128, %s1, [#allocation4]
    $region13: #{tpu_custom_call.1} parent=1 // pred_fallthru
      _
    // Predicated region
    $region14: #{tpu_custom_call.1} parent=1 // pred_check
      _
    $region15: #{tpu_custom_call.1} parent=1 // pred_check_branch
      %108 = sbr.rel (0) target = $region17
    $region16: #{tpu_custom_call.1} parent=1 // pred_region
      _
    $region17: #{tpu_custom_call.1} parent=1 // pred_fallthru
      _
    // Predicated region
    $region18: #{tpu_custom_call.1} parent=1 // pred_check
      _
    $region19: #{tpu_custom_call.1} parent=1 // pred_check_branch
      %110 = sbr.rel (0) target = $region21
    $region20: #{tpu_custom_call.1} parent=1 // pred_region
      %111 = dma.done [#allocation4], 128
    $region21: #{tpu_custom_call.1} parent=1 // pred_fallthru
      _
    // Predicated region
    $region22: #{tpu_custom_call.1} parent=1 // pred_check
      _
    $region23: #{tpu_custom_call.1} parent=1 // pred_check_branch
      %113 = sbr.rel (0) target = $region25
    $region24: #{tpu_custom_call.1} parent=1 // pred_region
      _
    $region25: #{tpu_custom_call.1} parent=1 // pred_fallthru
      _
    %114 = vsyncpa [#allocation3], 1
    %115 = vsyncpa [#allocation4], 1

</llo_original>
